<compile_context>
chip_gen: v7x
topology: tpu7x:2x2x1
jax: 0.10.0
libtpu: 0.0.40
codegen_flags: <defaults>
</compile_context>

<pallas_src>
import math
import functools

import jax
import jax.numpy as jnp
from jax import lax
from jax.experimental import pallas as pl
from jax.experimental.pallas import tpu as pltpu


_VMEM_LIMIT_BYTES = 48 * 1024 * 1024  # explicit scoped-VMEM budget; fits v5e/v6e/v7x


def _pick_tile(n, target):
    """Largest multiple-of-8 divisor of n that is <= target (fallback: n)."""
    if n <= target:
        return n
    start = target - (target % 8)
    for t in range(start, 7, -8):
        if n % t == 0:
            return t
    return n


def _compiler_params(semantics):
    return pltpu.CompilerParams(dimension_semantics=semantics,
                                vmem_limit_bytes=_VMEM_LIMIT_BYTES)


def _resident(shape):
    """Spec for arrays identical at every grid step (weights/biases/norm params):
    constant index_map + single-buffered, so no 2x double-buffer VMEM cost."""
    nd = len(shape)
    return pl.BlockSpec(shape, lambda *_: (0,) * nd,
                        pipeline_mode=pl.Buffered(1))


# --------------------------------------------------------------------------
# Kernel 1: GroupNorm-apply (stats pre-folded to per-channel scale/shift)
#           fused with the QKV projection: qkv = (x*scale + shift) @ Wqkv + b
# --------------------------------------------------------------------------
def _gn_qkv_kernel(x_ref, scale_ref, shift_ref, w_ref, b_ref, qkv_ref, *,
                   compute_dtype):
    x = x_ref[0]                                        # (TS, C) f32
    xn = x * scale_ref[0] + shift_ref[0]                # GroupNorm affine (per-channel)
    xn = xn.astype(compute_dtype)
    qkv = jnp.dot(xn, w_ref[...].astype(compute_dtype),
                  preferred_element_type=jnp.float32)   # (TS, 3C) f32 accum
    qkv = qkv + b_ref[...]
    qkv_ref[0] = qkv.astype(qkv_ref.dtype)


# --------------------------------------------------------------------------
# Kernel 2: flash attention, online softmax over KV tiles (reduction axis last)
# --------------------------------------------------------------------------
def _flash_kernel(q_ref, k_ref, v_ref, o_ref, m_sc, l_sc, acc_sc, *,
                  compute_dtype):
    ki = pl.program_id(3)

    @pl.when(ki == 0)
    def _init():
        m_sc[...] = jnp.full_like(m_sc, -jnp.inf)
        l_sc[...] = jnp.zeros_like(l_sc)
        acc_sc[...] = jnp.zeros_like(acc_sc)

    q = q_ref[0, 0].astype(compute_dtype)               # (TQ, Dh)
    k = k_ref[0, 0].astype(compute_dtype)               # (TK, Dh)
    v = v_ref[0, 0].astype(compute_dtype)               # (TK, Dh)

    # scores = q @ k^T without an explicit K transpose (contract last dims).
    # The (C/heads)**-0.25 scale is already folded into Wq/Wk in the wrapper.
    s = lax.dot_general(q, k, (((1,), (1,)), ((), ())),
                        preferred_element_type=jnp.float32)  # (TQ, TK) f32

    m_prev = m_sc[...]
    m_new = jnp.maximum(m_prev, jnp.max(s, axis=-1, keepdims=True))
    alpha = jnp.exp(m_prev - m_new)
    p = jnp.exp(s - m_new)                               # f32 softmax numerics
    l_sc[...] = alpha * l_sc[...] + jnp.sum(p, axis=-1, keepdims=True)
    acc_sc[...] = alpha * acc_sc[...] + jnp.dot(
        p.astype(compute_dtype), v, preferred_element_type=jnp.float32)
    m_sc[...] = m_new

    @pl.when(ki == pl.num_programs(3) - 1)
    def _finalize():
        inv_l = pl.reciprocal(l_sc[...], approx=False)
        o_ref[0, 0] = (acc_sc[...] * inv_l).astype(o_ref.dtype)


# --------------------------------------------------------------------------
# Kernel 3: output projection + residual add + rescale (token-major, lane-dense C)
# --------------------------------------------------------------------------
def _proj_residual_kernel(a_ref, res_ref, w_ref, b_ref, o_ref, *,
                          compute_dtype, inv_rescale):
    a = a_ref[0].astype(compute_dtype)                   # (TS, C)
    y = jnp.dot(a, w_ref[...].astype(compute_dtype),
                preferred_element_type=jnp.float32) + b_ref[...]
    o_ref[0] = ((y + res_ref[0]) * inv_rescale).astype(o_ref.dtype)


# --------------------------------------------------------------------------
# Wrapper
# --------------------------------------------------------------------------
def attention_block_pallas(x, params, *, num_groups, num_heads, eps=1e-5,
                           rescale_output_factor=1.0,
                           matmul_dtype=jnp.float32,
                           token_tile=512, q_tile=256, kv_tile=512):
    """x: (B, C, H, W) float32 (NCHW, same as the PyTorch module)."""
    B, C, H, W = x.shape
    S = H * W
    assert C % num_heads == 0 and C % num_groups == 0
    Dh = C // num_heads
    f32 = jnp.float32

    # token-major layout; all heavy relayouts happen here (XLA), not in-kernel.
    x_tok = x.reshape(B, C, S).transpose(0, 2, 1).astype(f32)      # (B, S, C)

    # ---- GroupNorm statistics (cheap, memory-bound single pass; centered
    #      variance). Folded into per-channel scale/shift so the kernel applies
    #      the norm with one FMA fused into the QKV matmul.
    Cg = C // num_groups
    xg = x_tok.reshape(B, S, num_groups, Cg)
    mean = jnp.mean(xg, axis=(1, 3))                               # (B, G)
    var = jnp.var(xg, axis=(1, 3))                                 # (B, G)
    rstd = lax.rsqrt(var + eps)
    mean_c = jnp.repeat(mean, Cg, axis=1)                          # (B, C)
    rstd_c = jnp.repeat(rstd, Cg, axis=1)                          # (B, C)
    gamma = params["gamma"].astype(f32)[None, :]                   # (1, C) lane-dense
    beta = params["beta"].astype(f32)[None, :]
    gn_scale = (gamma * rstd_c)[:, None, :]                        # (B, 1, C)
    gn_shift = (beta - mean_c * gamma * rstd_c)[:, None, :]        # (B, 1, C)

    # ---- fused QKV weight; fold the attention scale into Q and K parts ----
    scale = 1.0 / math.sqrt(math.sqrt(C / num_heads))
    wq = params["wq"].astype(f32) * scale
    wk = params["wk"].astype(f32) * scale
    wv = params["wv"].astype(f32)
    bq = params["bq"].astype(f32) * scale
    bk = params["bk"].astype(f32) * scale
    bv = params["bv"].astype(f32)
    # PyTorch Linear: y = x @ W.T + b  ->  pass W.T, concatenated to (C, 3C).
    w_qkv = jnp.concatenate([wq.T, wk.T, wv.T], axis=1).astype(matmul_dtype)
    b_qkv = jnp.concatenate([bq, bk, bv])[None, :]                 # (1, 3C) f32
    w_o = params["wo"].astype(f32).T.astype(matmul_dtype)          # (C, C)
    b_o = params["bo"].astype(f32)[None, :]                        # (1, C)

    TS = _pick_tile(S, token_tile)
    TQ = _pick_tile(S, q_tile)
    TK = _pick_tile(S, kv_tile)

    # ------------- kernel 1: GroupNorm-apply + fused QKV projection ----------
    qkv = pl.pallas_call(
        functools.partial(_gn_qkv_kernel, compute_dtype=matmul_dtype),
        out_shape=jax.ShapeDtypeStruct((B, S, 3 * C), f32),
        grid_spec=pltpu.PrefetchScalarGridSpec(
            num_scalar_prefetch=0,
            grid=(B, S // TS),
            in_specs=[
                pl.BlockSpec((1, TS, C), lambda b, s: (b, s, 0)),   # x (token tile)
                pl.BlockSpec((1, 1, C), lambda b, s: (b, 0, 0)),    # gn scale
                pl.BlockSpec((1, 1, C), lambda b, s: (b, 0, 0)),    # gn shift
                _resident((C, 3 * C)),                              # Wqkv^T
                _resident((1, 3 * C)),                              # bqkv
            ],
            out_specs=pl.BlockSpec((1, TS, 3 * C), lambda b, s: (b, s, 0)),
        ),
        compiler_params=_compiler_params(("parallel", "parallel")),
    )(x_tok, gn_scale, gn_shift, w_qkv, b_qkv)

    # split heads in the wrapper (XLA relayout; keeps kernels free of lane-slicing)
    q, k, v = jnp.split(qkv, 3, axis=-1)
    to_heads = lambda t: (t.reshape(B, S, num_heads, Dh)
                           .transpose(0, 2, 1, 3)
                           .astype(matmul_dtype))                   # (B, Hh, S, Dh)
    q, k, v = to_heads(q), to_heads(k), to_heads(v)

    # ------------- kernel 2: flash attention (KV reduction axis last) --------
    attn = pl.pallas_call(
        functools.partial(_flash_kernel, compute_dtype=matmul_dtype),
        out_shape=jax.ShapeDtypeStruct((B, num_heads, S, Dh), f32),
        grid_spec=pltpu.PrefetchScalarGridSpec(
            num_scalar_prefetch=0,
            grid=(B, num_heads, S // TQ, S // TK),
            in_specs=[
                pl.BlockSpec((1, 1, TQ, Dh), lambda b, h, qi, ki: (b, h, qi, 0)),
                pl.BlockSpec((1, 1, TK, Dh), lambda b, h, qi, ki: (b, h, ki, 0)),
                pl.BlockSpec((1, 1, TK, Dh), lambda b, h, qi, ki: (b, h, ki, 0)),
            ],
            out_specs=pl.BlockSpec((1, 1, TQ, Dh),
                                   lambda b, h, qi, ki: (b, h, qi, 0)),
            scratch_shapes=[
                pltpu.VMEM((TQ, 1), jnp.float32),    # running max
                pltpu.VMEM((TQ, 1), jnp.float32),    # running denom
                pltpu.VMEM((TQ, Dh), jnp.float32),   # output accumulator
            ],
        ),
        compiler_params=_compiler_params(
            ("parallel", "parallel", "parallel", "arbitrary")),
    )(q, k, v)                                                      # (B, Hh, S, Dh) f32

    attn = attn.transpose(0, 2, 1, 3).reshape(B, S, C)              # merge heads

    # ------------- kernel 3: output projection + residual + rescale ----------
    y_tok = pl.pallas_call(
        functools.partial(_proj_residual_kernel, compute_dtype=matmul_dtype,
                          inv_rescale=float(1.0 / rescale_output_factor)),
        out_shape=jax.ShapeDtypeStruct((B, S, C), x.dtype),
        grid_spec=pltpu.PrefetchScalarGridSpec(
            num_scalar_prefetch=0,
            grid=(B, S // TS),
            in_specs=[
                pl.BlockSpec((1, TS, C), lambda b, s: (b, s, 0)),   # attn
                pl.BlockSpec((1, TS, C), lambda b, s: (b, s, 0)),   # residual
                _resident((C, C)),                                  # Wo^T
                _resident((1, C)),                                  # bo
            ],
            out_specs=pl.BlockSpec((1, TS, C), lambda b, s: (b, s, 0)),
        ),
        compiler_params=_compiler_params(("parallel", "parallel")),
    )(attn, x_tok, w_o, b_o)

    # back to NCHW (wrapper-side layout plumbing)
    return y_tok.transpose(0, 2, 1).reshape(B, C, H, W).astype(x.dtype)


# --------------------------------------------------------------------------
# Pure-JAX reference mirroring the PyTorch forward (for validation)
# --------------------------------------------------------------------------
def attention_block_reference(x, params, *, num_groups, num_heads, eps=1e-5,
                              rescale_output_factor=1.0):
    B, C, H, W = x.shape
    S = H * W
    residual = x
    xg = x.reshape(B, num_groups, (C // num_groups) * S)
    mean = jnp.mean(xg, axis=-1, keepdims=True)
    var = jnp.var(xg, axis=-1, keepdims=True)
    xn = ((xg - mean) / jnp.sqrt(var + eps)).reshape(B, C, H, W)
    xn = xn * params["gamma"][None, :, None, None] + params["beta"][None, :, None, None]
    hs = xn.reshape(B, C, S).transpose(0, 2, 1)                    # (B, S, C)
    lin = lambda h, w, b: jnp.einsum("bsc,oc->bso", h, w) + b
    q = lin(hs, params["wq"], params["bq"])
    k = lin(hs, params["wk"], params["bk"])
    v = lin(hs, params["wv"], params["bv"])
    Dh = C // num_heads
    split = lambda t: t.reshape(B, S, num_heads, Dh).transpose(0, 2, 1, 3)
    q, k, v = split(q), split(k), split(v)
    scale = 1.0 / math.sqrt(math.sqrt(C / num_heads))
    scores = jnp.einsum("bhqd,bhkd->bhqk", q * scale, k * scale)
    probs = jax.nn.softmax(scores.astype(jnp.float32), axis=-1).astype(scores.dtype)
    o = jnp.einsum("bhqk,bhkd->bhqd", probs, v)
    o = o.transpose(0, 2, 1, 3).reshape(B, S, C)
    o = jnp.einsum("bsc,oc->bso", o, params["wo"]) + params["bo"]
    o = o.transpose(0, 2, 1).reshape(B, C, H, W)
    return (o + residual) / rescale_output_factor


if __name__ == "__main__":
    # Small shapes consistent with the module: C divisible by num_head_channels
    # and by norm_num_groups.
    B, C, H, W = 2, 64, 8, 8
    num_head_channels = 32
    num_heads = C // num_head_channels
    num_groups = 32
    eps = 1e-5
    rescale = 1.0

    key = jax.random.PRNGKey(0)
    keys = jax.random.split(key, 11)
    x = jax.random.normal(keys[0], (B, C, H, W), dtype=jnp.float32)
    params = {
        "gamma": 1.0 + 0.02 * jax.random.normal(keys[1], (C,), jnp.float32),
        "beta": 0.02 * jax.random.normal(keys[2], (C,), jnp.float32),
        "wq": 0.05 * jax.random.normal(keys[3], (C, C), jnp.float32),
        "bq": 0.05 * jax.random.normal(keys[4], (C,), jnp.float32),
        "wk": 0.05 * jax.random.normal(keys[5], (C, C), jnp.float32),
        "bk": 0.05 * jax.random.normal(keys[6], (C,), jnp.float32),
        "wv": 0.05 * jax.random.normal(keys[7], (C, C), jnp.float32),
        "bv": 0.05 * jax.random.normal(keys[8], (C,), jnp.float32),
        "wo": 0.05 * jax.random.normal(keys[9], (C, C), jnp.float32),
        "bo": 0.05 * jax.random.normal(keys[10], (C,), jnp.float32),
    }

    ref = attention_block_reference(
        x, params, num_groups=num_groups, num_heads=num_heads,
        eps=eps, rescale_output_factor=rescale)

    # f32 path (strict check)
    out = attention_block_pallas(
        x, params, num_groups=num_groups, num_heads=num_heads,
        eps=eps, rescale_output_factor=rescale, matmul_dtype=jnp.float32)
    out = jax.block_until_ready(out)
    assert jnp.allclose(out, ref, atol=1e-4, rtol=1e-4), (
        float(jnp.max(jnp.abs(out - ref))))

    # bf16 MXU-operand path (v6e/v7x recommendation) — looser tolerance.
    out_bf16 = attention_block_pallas(
        x, params, num_groups=num_groups, num_heads=num_heads,
        eps=eps, rescale_output_factor=rescale, matmul_dtype=jnp.bfloat16)
    out_bf16 = jax.block_until_ready(out_bf16)
    assert jnp.allclose(out_bf16, ref, atol=5e-2, rtol=5e-2), (
        float(jnp.max(jnp.abs(out_bf16 - ref))))

    print("KERNEL_OK")
</pallas_src>

<mosaic_0001>
module attributes {stable_mosaic.version = 11 : i64} {
  func.func @_gn_qkv_kernel(%arg0: i32, %arg1: i32, %arg2: memref<1x64x64xf32, #tpu.memory_space<vmem>>, %arg3: memref<1x1x64xf32, #tpu.memory_space<vmem>>, %arg4: memref<1x1x64xf32, #tpu.memory_space<vmem>>, %arg5: memref<64x192xf32, #tpu.memory_space<vmem>>, %arg6: memref<1x192xf32, #tpu.memory_space<vmem>>, %arg7: memref<1x64x192xf32, #tpu.memory_space<vmem>>) attributes {dimension_semantics = [#tpu.dimension_semantics<parallel>, #tpu.dimension_semantics<parallel>], iteration_bounds = array<i64: 2, 1>, scalar_prefetch = 0 : i64, scratch_operands = 0 : i64, tpu.core_type = #tpu.core_type<tc>, window_params = [{transform_indices = @transform_0, window_bounds = array<i64: 1, 64, 64>}, {transform_indices = @transform_1, window_bounds = array<i64: 1, 1, 64>}, {transform_indices = @transform_2, window_bounds = array<i64: 1, 1, 64>}, {pipeline_mode = #tpu.pipeline_mode<synchronous>, transform_indices = @transform_3, window_bounds = array<i64: 64, 192>}, {pipeline_mode = #tpu.pipeline_mode<synchronous>, transform_indices = @transform_4, window_bounds = array<i64: 1, 192>}, {transform_indices = @transform_5, window_bounds = array<i64: 1, 64, 192>}]} {
    %c0 = arith.constant 0 : index
    %c0_0 = arith.constant 0 : index
    %c0_1 = arith.constant 0 : index
    %0 = vector.load %arg2[%c0, %c0_0, %c0_1] : memref<1x64x64xf32, #tpu.memory_space<vmem>>, vector<1x64x64xf32>
    %1 = vector.shape_cast %0 : vector<1x64x64xf32> to vector<64x64xf32>
    %c0_2 = arith.constant 0 : index
    %c0_3 = arith.constant 0 : index
    %c0_4 = arith.constant 0 : index
    %2 = vector.load %arg3[%c0_2, %c0_3, %c0_4] : memref<1x1x64xf32, #tpu.memory_space<vmem>>, vector<1x1x64xf32>
    %3 = vector.shape_cast %2 : vector<1x1x64xf32> to vector<1x64xf32>
    %4 = vector.broadcast %3 : vector<1x64xf32> to vector<64x64xf32>
    %5 = arith.mulf %1, %4 : vector<64x64xf32>
    %c0_5 = arith.constant 0 : index
    %c0_6 = arith.constant 0 : index
    %c0_7 = arith.constant 0 : index
    %6 = vector.load %arg4[%c0_5, %c0_6, %c0_7] : memref<1x1x64xf32, #tpu.memory_space<vmem>>, vector<1x1x64xf32>
    %7 = vector.shape_cast %6 : vector<1x1x64xf32> to vector<1x64xf32>
    %8 = vector.broadcast %7 : vector<1x64xf32> to vector<64x64xf32>
    %9 = arith.addf %5, %8 : vector<64x64xf32>
    %c0_8 = arith.constant 0 : index
    %c0_9 = arith.constant 0 : index
    %10 = vector.load %arg5[%c0_8, %c0_9] : memref<64x192xf32, #tpu.memory_space<vmem>>, vector<64x192xf32>
    %cst = arith.constant dense<0.000000e+00> : vector<64x192xf32>
    %11 = tpu.matmul %9, %10, %cst {dimension_numbers = #tpu.dot_dimension_numbers<[1], [0], [0], [1], [0, 0, 1, 1], [], []>} : vector<64x64xf32>, vector<64x192xf32>, vector<64x192xf32> -> vector<64x192xf32>
    %c0_10 = arith.constant 0 : index
    %c0_11 = arith.constant 0 : index
    %12 = vector.load %arg6[%c0_10, %c0_11] : memref<1x192xf32, #tpu.memory_space<vmem>>, vector<1x192xf32>
    %13 = vector.broadcast %12 : vector<1x192xf32> to vector<64x192xf32>
    %14 = arith.addf %11, %13 : vector<64x192xf32>
    %c0_12 = arith.constant 0 : index
    %c0_13 = arith.constant 0 : index
    %c0_14 = arith.constant 0 : index
    %15 = vector.load %arg7[%c0_12, %c0_13, %c0_14] : memref<1x64x192xf32, #tpu.memory_space<vmem>>, vector<1x64x192xf32>
    %16 = vector.shape_cast %15 : vector<1x64x192xf32> to vector<64x192xf32>
    %17 = vector.shape_cast %14 : vector<64x192xf32> to vector<1x64x192xf32>
    tpu.vector_store %arg7[%c0_12, %c0_13, %c0_14], %17 {strides = array<i32>} : memref<1x64x192xf32, #tpu.memory_space<vmem>>, vector<1x64x192xf32>,
    return
  }
  func.func @transform_0(%arg0: i32, %arg1: i32) -> (i32, i32, i32) {
    %c0_i32 = arith.constant 0 : i32
    %c0_i32_0 = arith.constant 0 : i32
    return %arg0, %arg1, %c0_i32 : i32, i32, i32
  }
  func.func @transform_1(%arg0: i32, %arg1: i32) -> (i32, i32, i32) {
    %c0_i32 = arith.constant 0 : i32
    %c0_i32_0 = arith.constant 0 : i32
    %c0_i32_1 = arith.constant 0 : i32
    return %arg0, %c0_i32, %c0_i32_0 : i32, i32, i32
  }
  func.func @transform_2(%arg0: i32, %arg1: i32) -> (i32, i32, i32) {
    %c0_i32 = arith.constant 0 : i32
    %c0_i32_0 = arith.constant 0 : i32
    %c0_i32_1 = arith.constant 0 : i32
    return %arg0, %c0_i32, %c0_i32_0 : i32, i32, i32
  }
  func.func @transform_3(%arg0: i32, %arg1: i32) -> (i32, i32) {
    %c0_i32 = arith.constant 0 : i32
    %c0_i32_0 = arith.constant 0 : i32
    %c0_i32_1 = arith.constant 0 : i32
    return %c0_i32, %c0_i32_0 : i32, i32
  }
  func.func @transform_4(%arg0: i32, %arg1: i32) -> (i32, i32) {
    %c0_i32 = arith.constant 0 : i32
    %c0_i32_0 = arith.constant 0 : i32
    %c0_i32_1 = arith.constant 0 : i32
    return %c0_i32, %c0_i32_0 : i32, i32
  }
  func.func @transform_5(%arg0: i32, %arg1: i32) -> (i32, i32, i32) {
    %c0_i32 = arith.constant 0 : i32
    %c0_i32_0 = arith.constant 0 : i32
    return %arg0, %arg1, %c0_i32 : i32, i32, i32
  }
}

</mosaic_0001>

<llo_original>
// kernel: tpu_custom_call.1
$region0: #{tpu_custom_call.1}
  #allocation0 [shape = 'u32[]', space=smem, size = 0x4, offset = 0x4, fixed_abs, tag = 'smem constant byte address 0x4 - core index']
  #allocation1 [shape = 'u32[144,128]{1,0:T(1,128)}', space=vmem, size = 0x12000, scoped, tag = 'internal scratch']
  %s0 = inlined_call_operand.hbm [shape: f32[2,64,64], index: 0, kind: input, shape index: {}]
  %s1 = inlined_call_operand.vmem [shape: f32[2,1,64], index: 1, kind: input, shape index: {}]
  %s2 = inlined_call_operand.vmem [shape: f32[2,1,64], index: 2, kind: input, shape index: {}]
  %s3 = inlined_call_operand.hbm [shape: f32[64,192], index: 3, kind: input, shape index: {}]
  %s4 = inlined_call_operand.vmem [shape: f32[1,192], index: 4, kind: input, shape index: {}]
  %s5 = inlined_call_operand.hbm [shape: f32[2,64,192], index: 5, kind: output, shape index: {}]
  %s6 = sld [smem:[#allocation0]]
  $region61: #{tpu_custom_call.1} parent=0
    _
  %s8 = ssub.s32 1, %s6
  %s9 = scalar_select 0, %s8, %s6
  $region1: #{tpu_custom_call.1} parent=0
    #allocation2 [shape = 'u8[65536]{0}', space=vmem, size = 0x10000, scoped, tag = 'input window, operand 0']
    #allocation3 [shape = 's32[2]{0}', space=sflag, size = 0x8, scoped, tag = 'scoped memory for tpu_custom_call.1']
    #allocation4 [shape = 's32[2]{0}', space=sflag, size = 0x8, scoped, tag = 'scoped memory for tpu_custom_call.1']
    #allocation5 [shape = 'u8[65536]{0}', space=vmem, size = 0x10000, scoped, tag = 'input window, operand 3, single buffered']
    #allocation6 [shape = 's32[1]{0}', space=sflag, size = 0x4, scoped, tag = 'scoped memory for tpu_custom_call.1']
    #allocation7 [shape = 'u8[131072]{0}', space=vmem, size = 0x20000, scoped, tag = 'output window, operand 0']
    %10 = vsyncpa [#allocation3], 0
    %s11 = scalar_lea.sflag [#allocation3], 1
    %12 = vsyncpa %s11, 0
    %13 = vsyncpa [#allocation6], 0
    %14 = vsyncpa [#allocation4], 0
    %s15 = scalar_lea.sflag [#allocation4], 1
    %16 = vsyncpa %s15, 0
    loop: start=0, step=1, limit=4
    $region2: #{tpu_custom_call.1} parent=1 // loop_pre_header
      _
    $region3: #{tpu_custom_call.1} parent=1 // loop_header
      %s18 = sphi 0, %s22
      %p19 = scmp.ge.s32.totalorder %s18, 4
      %s25 = sphi 0, %s37
      %s26 = sphi 0, %s33
      %s27 = sphi 0, %s25
      %s28 = sphi 0, %s26
      %s29 = sphi 0, %s27
      %s30 = sphi 0, %s28
      %s42 = sphi 0, %s44
      %s45 = sphi 0, %s42
      %s46 = sphi 0, %s45
      %s62 = sphi 0, %s46
      %s68 = sphi 0, %s70
      %s71 = sphi 0, %s68
      %s72 = sphi 0, %s71
      %s88 = sphi 0, %s72
      %s94 = sphi 0, %s96
      %s97 = sphi 0, %s94
      %s98 = sphi 0, %s97
      %s114 = sphi 0, %s98
      %s118 = sphi 0, %s118
      %s120 = sphi 0, %s118
      %s121 = sphi 0, %s120
      %s135 = sphi 0, %s121
      %s139 = sphi 0, %s139
      %s141 = sphi 0, %s139
      %s142 = sphi 0, %s141
      %s156 = sphi 0, %s142
      %s164 = sphi 0, %s166
      %s167 = sphi 0, %s164
      %s168 = sphi 0, %s167
      %s184 = sphi 0, %s168
    $region4: #{tpu_custom_call.1} parent=1 // loop_header_branch
      %21 = sbr.rel (%p19) target = $region8
    $region5: #{tpu_custom_call.1} parent=1 // loop_body
      %s23 = ssub.s32 %s18, 1
      %s24 = ssub.s32 %s18, 2
      %s31 = sadd.s32 1, %s26
      %p32 = scmp.ge.s32.totalorder %s31, 1
      %s33 = scalar_select %p32, 0, %s31
      %s34 = sadd.s32 1, %s25
      %s35 = scalar_select %p32, %s34, %s25
      %p36 = scmp.ge.s32.totalorder %s35, 2
      %s37 = scalar_select %p36, 0, %s35
      %s38 = ssub.s32 %s25, %s37
      %s39 = ssub.s32 %s26, %s33
      %s40 = sor.u32 %s38, %s39
      %p41 = scmp.eq.s32.totalorder %s40, 0
      %s43 = sadd.s32 %s42, 1
      %s44 = scalar_select %p41, %s42, %s43
      %p47 = pneg %p41
      %p48 = scmp.eq.s32.totalorder %s18, 1
      %p49 = por %p47, %p48
      %p50 = scmp.ne.s32.totalorder %s42, %s45
      %p51 = scmp.eq.s32.totalorder %s18, 0
      %p52 = por %p50, %p51
      %p53 = scmp.ne.s32.totalorder %s42, %s45
      %p54 = scmp.eq.s32.totalorder %s23, 1
      %p55 = por %p53, %p54
      %p56 = scmp.ne.s32.totalorder %s45, %s46
      %p57 = scmp.eq.s32.totalorder %s23, 0
      %p58 = por %p56, %p57
      %p59 = scmp.ne.s32.totalorder %s45, %s46
      %p60 = scmp.eq.s32.totalorder %s24, 1
      %p61 = por %p59, %p60
      %p63 = scmp.ne.s32.totalorder %s46, %s62
      %p64 = scmp.eq.s32.totalorder %s24, 0
      %p65 = por %p63, %p64
      %s66 = ssub.s32 %s25, %s37
      %p67 = scmp.eq.s32.totalorder %s66, 0
      %s69 = sadd.s32 %s68, 1
      %s70 = scalar_select %p67, %s68, %s69
      %p73 = pneg %p67
      %p74 = scmp.eq.s32.totalorder %s18, 1
      %p75 = por %p73, %p74
      %p76 = scmp.ne.s32.totalorder %s68, %s71
      %p77 = scmp.eq.s32.totalorder %s18, 0
      %p78 = por %p76, %p77
      %p79 = scmp.ne.s32.totalorder %s68, %s71
      %p80 = scmp.eq.s32.totalorder %s23, 1
      %p81 = por %p79, %p80
      %p82 = scmp.ne.s32.totalorder %s71, %s72
      %p83 = scmp.eq.s32.totalorder %s23, 0
      %p84 = por %p82, %p83
      %p85 = scmp.ne.s32.totalorder %s71, %s72
      %p86 = scmp.eq.s32.totalorder %s24, 1
      %p87 = por %p85, %p86
      %p89 = scmp.ne.s32.totalorder %s72, %s88
      %p90 = scmp.eq.s32.totalorder %s24, 0
      %p91 = por %p89, %p90
      %s92 = ssub.s32 %s25, %s37
      %p93 = scmp.eq.s32.totalorder %s92, 0
      %s95 = sadd.s32 %s94, 1
      %s96 = scalar_select %p93, %s94, %s95
      %p99 = pneg %p93
      %p100 = scmp.eq.s32.totalorder %s18, 1
      %p101 = por %p99, %p100
      %p102 = scmp.ne.s32.totalorder %s94, %s97
      %p103 = scmp.eq.s32.totalorder %s18, 0
      %p104 = por %p102, %p103
      %p105 = scmp.ne.s32.totalorder %s94, %s97
      %p106 = scmp.eq.s32.totalorder %s23, 1
      %p107 = por %p105, %p106
      %p108 = scmp.ne.s32.totalorder %s97, %s98
      %p109 = scmp.eq.s32.totalorder %s23, 0
      %p110 = por %p108, %p109
      %p111 = scmp.ne.s32.totalorder %s97, %s98
      %p112 = scmp.eq.s32.totalorder %s24, 1
      %p113 = por %p111, %p112
      %p115 = scmp.ne.s32.totalorder %s98, %s114
      %p116 = scmp.eq.s32.totalorder %s24, 0
      %p117 = por %p115, %p116
      %s119 = sadd.s32 %s118, 1
      %p122 = scmp.eq.s32.totalorder %s18, 1
      %p123 = scmp.ne.s32.totalorder %s118, %s120
      %p124 = scmp.eq.s32.totalorder %s18, 0
      %p125 = por %p123, %p124
      %p126 = scmp.ne.s32.totalorder %s118, %s120
      %p127 = scmp.eq.s32.totalorder %s23, 1
      %p128 = por %p126, %p127
      %p129 = scmp.ne.s32.totalorder %s120, %s121
      %p130 = scmp.eq.s32.totalorder %s23, 0
      %p131 = por %p129, %p130
      %p132 = scmp.ne.s32.totalorder %s120, %s121
      %p133 = scmp.eq.s32.totalorder %s24, 1
      %p134 = por %p132, %p133
      %p136 = scmp.ne.s32.totalorder %s121, %s135
      %p137 = scmp.eq.s32.totalorder %s24, 0
      %p138 = por %p136, %p137
      %s140 = sadd.s32 %s139, 1
      %p143 = scmp.eq.s32.totalorder %s18, 1
      %p144 = scmp.ne.s32.totalorder %s139, %s141
      %p145 = scmp.eq.s32.totalorder %s18, 0
      %p146 = por %p144, %p145
      %p147 = scmp.ne.s32.totalorder %s139, %s141
      %p148 = scmp.eq.s32.totalorder %s23, 1
      %p149 = por %p147, %p148
      %p150 = scmp.ne.s32.totalorder %s141, %s142
      %p151 = scmp.eq.s32.totalorder %s23, 0
      %p152 = por %p150, %p151
      %p153 = scmp.ne.s32.totalorder %s141, %s142
      %p154 = scmp.eq.s32.totalorder %s24, 1
      %p155 = por %p153, %p154
      %p157 = scmp.ne.s32.totalorder %s142, %s156
      %p158 = scmp.eq.s32.totalorder %s24, 0
      %p159 = por %p157, %p158
      %s160 = ssub.s32 %s25, %s37
      %s161 = ssub.s32 %s26, %s33
      %s162 = sor.u32 %s160, %s161
      %p163 = scmp.eq.s32.totalorder %s162, 0
      %s165 = sadd.s32 %s164, 1
      %s166 = scalar_select %p163, %s164, %s165
      %p169 = pneg %p163
      %p170 = scmp.eq.s32.totalorder %s18, 1
      %p171 = por %p169, %p170
      %p172 = scmp.ne.s32.totalorder %s164, %s167
      %p173 = scmp.eq.s32.totalorder %s18, 0
      %p174 = por %p172, %p173
      %p175 = scmp.ne.s32.totalorder %s164, %s167
      %p176 = scmp.eq.s32.totalorder %s23, 1
      %p177 = por %p175, %p176
      %p178 = scmp.ne.s32.totalorder %s167, %s168
      %p179 = scmp.eq.s32.totalorder %s23, 0
      %p180 = por %p178, %p179
      %p181 = scmp.ne.s32.totalorder %s167, %s168
      %p182 = scmp.eq.s32.totalorder %s24, 1
      %p183 = por %p181, %p182
      %p185 = scmp.ne.s32.totalorder %s168, %s184
      %p186 = scmp.eq.s32.totalorder %s24, 0
      %p187 = por %p185, %p186
      %p188 = scmp.le.s32.totalorder 1, %s18
      %p189 = scmp.lt.s32.totalorder %s18, 3
      %p190 = pnand %p188, %p189
      %p191 = pneg %p190
      // Predicated region
      $region9: #{tpu_custom_call.1} parent=5 // pred_check
        _
      $region10: #{tpu_custom_call.1} parent=5 // pred_check_branch
        %193 = sbr.rel (%p190) target = $region12
      $region11: #{tpu_custom_call.1} parent=5 // pred_region
        %s194 = ssub.s32 %s18, 1
        // Predicated region
        $region13: #{tpu_custom_call.1} parent=11 // pred_check
          %p195 = pneg %p131
        $region14: #{tpu_custom_call.1} parent=11 // pred_check_branch
          %197 = sbr.rel (%p195) target = $region16
        $region15: #{tpu_custom_call.1} parent=11 // pred_region
          %s199 = ssub.s32 2048, 2048
          %200 = vsyncadd [#allocation6], %s199
          %s201 = sshll.u32 [#allocation5], 4
          %s202 = int_to_ptr.vmem [resolvable:$true] %s201
          %207 = dma.hbm_to_vmem [thread:$0]  %s3, 2048, %s202, [#allocation6], 256, 256, 16
        $region16: #{tpu_custom_call.1} parent=11 // pred_fallthru
          _
        // Predicated region
        $region17: #{tpu_custom_call.1} parent=11 // pred_check
          %p208 = pneg %p152
        $region18: #{tpu_custom_call.1} parent=11 // pred_check_branch
          %210 = sbr.rel (%p208) target = $region20
        $region19: #{tpu_custom_call.1} parent=11 // pred_region
          _
        $region20: #{tpu_custom_call.1} parent=11 // pred_fallthru
          _
      $region12: #{tpu_custom_call.1} parent=5 // pred_fallthru
        _
      %p211 = scmp.lt.s32.totalorder %s18, 2
      // Predicated region
      $region21: #{tpu_custom_call.1} parent=5 // pred_check
        %p212 = pneg %p211
      $region22: #{tpu_custom_call.1} parent=5 // pred_check_branch
        %214 = sbr.rel (%p212) target = $region24
      $region23: #{tpu_custom_call.1} parent=5 // pred_region
        // Predicated region
        $region25: #{tpu_custom_call.1} parent=23 // pred_check
          %p215 = pneg %p52
        $region26: #{tpu_custom_call.1} parent=23 // pred_check_branch
          %217 = sbr.rel (%p215) target = $region28
        $region27: #{tpu_custom_call.1} parent=23 // pred_region
          %s218 = sand.u32 %s42, 1
          %s219 = scalar_lea.sflag [#allocation3], %s218
          %s220 = sand.u32 %s42, 1
          %s221 = smul.addr %s220, 64
          %s222 = scalar_lea.vmem [#allocation2], %s221
          %s223 = smul.u32 8, %s26
          %s225 = ssub.s32 1024, 1024
          %226 = vsyncadd %s219, %s225
          %s227 = smul.addr %s25, 8
          %s228 = sadd.s32 %s223, %s227
          %s229 = smul.addr %s228, 128
          %s230 = scalar_lea.hbm %s0, %s229
          %s231 = sshll.u32 %s222, 4
          %s232 = int_to_ptr.vmem [resolvable:$true] %s231
          %237 = dma.hbm_to_vmem [thread:$0]  %s230, 1024, %s232, %s219, 128, 128, 8
        $region28: #{tpu_custom_call.1} parent=23 // pred_fallthru
          _
        // Predicated region
        $region29: #{tpu_custom_call.1} parent=23 // pred_check
          %p238 = pneg %p78
        $region30: #{tpu_custom_call.1} parent=23 // pred_check_branch
          %240 = sbr.rel (%p238) target = $region32
        $region31: #{tpu_custom_call.1} parent=23 // pred_region
          %p241 = scmp.lt.s32.totalorder %s25, 1
          %s242 = scalar_select %p241, %s25, 1
          %s243 = scalar_lea.vmem %s1, %s242
        $region32: #{tpu_custom_call.1} parent=23 // pred_fallthru
          _
        // Predicated region
        $region33: #{tpu_custom_call.1} parent=23 // pred_check
          %p244 = pneg %p104
        $region34: #{tpu_custom_call.1} parent=23 // pred_check_branch
          %246 = sbr.rel (%p244) target = $region36
        $region35: #{tpu_custom_call.1} parent=23 // pred_region
          %p247 = scmp.lt.s32.totalorder %s25, 1
          %s248 = scalar_select %p247, %s25, 1
          %s249 = scalar_lea.vmem %s2, %s248
        $region36: #{tpu_custom_call.1} parent=23 // pred_fallthru
          _
      $region24: #{tpu_custom_call.1} parent=5 // pred_fallthru
        _
      %p250 = scmp.le.s32.totalorder 1, %s18
      %p251 = scmp.lt.s32.totalorder %s18, 3
      %p252 = pnand %p250, %p251
      %p253 = pneg %p252
      // Predicated region
      $region37: #{tpu_custom_call.1} parent=5 // pred_check
        _
      $region38: #{tpu_custom_call.1} parent=5 // pred_check_branch
        %255 = sbr.rel (%p252) target = $region40
      $region39: #{tpu_custom_call.1} parent=5 // pred_region
        %s256 = ssub.s32 %s18, 1
        %s257 = sand.u32 %s45, 1
        %s258 = scalar_lea.sflag [#allocation3], %s257
        %s259 = sand.u32 %s45, 1
        %s260 = smul.addr %s259, 64
        %s261 = scalar_lea.vmem [#allocation2], %s260
        // Predicated region
        $region41: #{tpu_custom_call.1} parent=39 // pred_check
          %p262 = pneg %p58
        $region42: #{tpu_custom_call.1} parent=39 // pred_check_branch
          %264 = sbr.rel (%p262) target = $region44
        $region43: #{tpu_custom_call.1} parent=39 // pred_region
          %265 = dma.done %s258, 1024
        $region44: #{tpu_custom_call.1} parent=39 // pred_fallthru
          _
        // Predicated region
        $region45: #{tpu_custom_call.1} parent=39 // pred_check
          %p266 = pneg %p131
        $region46: #{tpu_custom_call.1} parent=39 // pred_check_branch
          %268 = sbr.rel (%p266) target = $region48
        $region47: #{tpu_custom_call.1} parent=39 // pred_region
          %269 = dma.done [#allocation6], 2048
        $region48: #{tpu_custom_call.1} parent=39 // pred_fallthru
          _
        %s270 = sand.u32 %s45, 1
        %s271 = scalar_lea.sflag [#allocation3], %s270
        %s272 = sand.u32 %s45, 1
        %s273 = smul.addr %s272, 64
        %s274 = scalar_lea.vmem [#allocation2], %s273
        %p275 = pneg %p58
        %p276 = pneg %p55
        %p277 = scmp.lt.s32.totalorder %s27, 1
        %s278 = scalar_select %p277, %s27, 1
        %s279 = scalar_lea.vmem %s1, %s278
        %p280 = pneg %p84
        %p281 = pneg %p81
        %p282 = scmp.lt.s32.totalorder %s27, 1
        %s283 = scalar_select %p282, %s27, 1
        %s284 = scalar_lea.vmem %s2, %s283
        %p285 = pneg %p110
        %p286 = pneg %p107
        %p287 = pneg %p131
        %p288 = pneg %p128
        %p289 = pneg %p152
        %p290 = pneg %p149
        %p291 = pneg %p180
        %p292 = pneg %p177
        %s293 = sand.u32 %s167, 1
        %s294 = scalar_lea.sflag [#allocation4], %s293
        %s295 = sand.u32 %s167, 1
        %s296 = smul.addr %s295, 128
        %s297 = scalar_lea.vmem [#allocation7], %s296
        %s298 = smul.u32 8, %s28
        %p299 = scmp.lt.s32.totalorder %s27, 1
        %s300 = scalar_select %p299, %s27, 1
        %s301 = scalar_lea.vmem %s1, %s300
        %p302 = scmp.lt.s32.totalorder %s27, 1
        %s303 = scalar_select %p302, %s27, 1
        %s304 = scalar_lea.vmem %s2, %s303
        %s305 = smul.u32 8, %s28
        %v306 = vld [vmem:[%s261] sm:$0xff]
        %v307 = vld [vmem:[%s261 + $0x8] sm:$0xff]
        %v308 = vld [vmem:[%s261 + $0x10] sm:$0xff]
        %v309 = vld [vmem:[%s261 + $0x18] sm:$0xff]
        %v310 = vld [vmem:[%s261 + $0x20] sm:$0xff]
        %v311 = vld [vmem:[%s261 + $0x28] sm:$0xff]
        %v312 = vld [vmem:[%s261 + $0x30] sm:$0xff]
        %v313 = vld [vmem:[%s261 + $0x38] sm:$0xff]
        %v314 = vld [vmem:[%s301] sm:$0x1]
        %v316 = vlaneseq
        %v317 = vshrl.u32 %v316, 7
        %v318 = vsub.s32 0, %v317
        %v319 = vrot.slane %v314, %v318
        %v321 = vmul.f32 %v306, %v319
        %v322 = vmul.f32 %v307, %v319
        %v323 = vmul.f32 %v308, %v319
        %v324 = vmul.f32 %v309, %v319
        %v325 = vmul.f32 %v310, %v319
        %v326 = vmul.f32 %v311, %v319
        %v327 = vmul.f32 %v312, %v319
        %v328 = vmul.f32 %v313, %v319
        %v329 = vld [vmem:[%s304] sm:$0x1]
        %v331 = vlaneseq
        %v332 = vshrl.u32 %v331, 7
        %v333 = vsub.s32 0, %v332
        %v334 = vrot.slane %v329, %v333
        %v336 = vadd.f32 %v321, %v334
        %v337 = vadd.f32 %v322, %v334
        %v338 = vadd.f32 %v323, %v334
        %v339 = vadd.f32 %v324, %v334
        %v340 = vadd.f32 %v325, %v334
        %v341 = vadd.f32 %v326, %v334
        %v342 = vadd.f32 %v327, %v334
        %v343 = vadd.f32 %v328, %v334
        %v344 = vld [vmem:[#allocation5] sm:$0xff]
        %v345 = vld [vmem:[#allocation5 + $0x8] sm:$0xff]
        %v346 = vld [vmem:[#allocation5 + $0x10] sm:$0xff]
        %v347 = vld [vmem:[#allocation5 + $0x18] sm:$0xff]
        %v348 = vld [vmem:[#allocation5 + $0x20] sm:$0xff]
        %v349 = vld [vmem:[#allocation5 + $0x28] sm:$0xff]
        %v350 = vld [vmem:[#allocation5 + $0x30] sm:$0xff]
        %v351 = vld [vmem:[#allocation5 + $0x38] sm:$0xff]
        %v352 = vld [vmem:[#allocation5 + $0x40] sm:$0xff]
        %v353 = vld [vmem:[#allocation5 + $0x48] sm:$0xff]
        %v354 = vld [vmem:[#allocation5 + $0x50] sm:$0xff]
        %v355 = vld [vmem:[#allocation5 + $0x58] sm:$0xff]
        %v356 = vld [vmem:[#allocation5 + $0x60] sm:$0xff]
        %v357 = vld [vmem:[#allocation5 + $0x68] sm:$0xff]
        %v358 = vld [vmem:[#allocation5 + $0x70] sm:$0xff]
        %v359 = vld [vmem:[#allocation5 + $0x78] sm:$0xff]
        %v360 = vld [vmem:[%s4] sm:$0x3]
        %v362 = vlaneseq
        %v363 = vshrl.u32 %v362, 7
        %v364 = vsub.s32 0, %v363
        %v365 = vrot.slane %v360, %v364
        %v366 = vlaneseq
        %v367 = vshrl.u32 %v366, 7
        %v368 = vsub.s32 1, %v367
        %v369 = vrot.slane %v360, %v368
        %vm372 = vcmask 523264
        %v374 = vsel %vm372, %v336, 0
        %v377 = vsel %vm372, %v337, 0
        %v380 = vsel %vm372, %v338, 0
        %v383 = vsel %vm372, %v339, 0
        %v386 = vsel %vm372, %v340, 0
        %v389 = vsel %vm372, %v341, 0
        %v392 = vsel %vm372, %v342, 0
        %v395 = vsel %vm372, %v343, 0
        %397 = vmatprep.subr.mxu0 %v345
        %398 = vmatpush1.msra.mxu0 %v344
        %399 = vmatprep.subr.mxu0 %v347
        %400 = vmatpush1.msra.mxu0 %v346
        %401 = vmatprep.subr.mxu0 %v349
        %402 = vmatpush1.msra.mxu0 %v348
        %403 = vmatprep.subr.mxu0 %v351
        %404 = vmatpush1.msra.mxu0 %v350
        %405 = vmatprep.subr.mxu0 %v353
        %406 = vmatpush1.msra.mxu0 %v352
        %407 = vmatprep.subr.mxu0 %v355
        %408 = vmatpush1.msra.mxu0 %v354
        %409 = vmatprep.subr.mxu0 %v357
        %410 = vmatpush1.msra.mxu0 %v356
        %411 = vmatprep.subr.mxu0 %v359
        %412 = vmatpush1.msra.mxu0 %v358
        %413 = vmatprep.subr.mxu0 0.0
        %414 = vmatpush1.msra.mxu0 0.0
        %415 = vmatprep.subr.mxu0 0.0
        %416 = vmatpush1.msra.mxu0 0.0
        %417 = vmatprep.subr.mxu0 0.0
        %418 = vmatpush1.msra.mxu0 0.0
        %419 = vmatprep.subr.mxu0 0.0
        %420 = vmatpush1.msra.mxu0 0.0
        %421 = vmatprep.subr.mxu0 0.0
        %422 = vmatpush1.msra.mxu0 0.0
        %423 = vmatprep.subr.mxu0 0.0
        %424 = vmatpush1.msra.mxu0 0.0
        %425 = vmatprep.subr.mxu0 0.0
        %426 = vmatpush1.msra.mxu0 0.0
        %427 = vmatprep.subr.mxu0 0.0
        %428 = vmatpush1.msra.mxu0 0.0
        %429 = vmatprep.subr.mxu0 0.0
        %430 = vmatpush1.msra.mxu0 0.0
        %431 = vmatprep.subr.mxu0 0.0
        %432 = vmatpush1.msra.mxu0 0.0
        %433 = vmatprep.subr.mxu0 0.0
        %434 = vmatpush1.msra.mxu0 0.0
        %435 = vmatprep.subr.mxu0 0.0
        %436 = vmatpush1.msra.mxu0 0.0
        %437 = vmatprep.subr.mxu0 0.0
        %438 = vmatpush1.msra.mxu0 0.0
        %439 = vmatprep.subr.mxu0 0.0
        %440 = vmatpush1.msra.mxu0 0.0
        %441 = vmatprep.subr.mxu0 0.0
        %442 = vmatpush1.msra.mxu0 0.0
        %443 = vmatprep.subr.mxu0 0.0
        %444 = vmatpush1.msra.mxu0 0.0
        %445 = vmatprep.subr.mxu0 0.0
        %446 = vmatpush1.msra.mxu0 0.0
        %447 = vmatprep.subr.mxu0 0.0
        %448 = vmatpush1.msra.mxu0 0.0
        %449 = vmatprep.subr.mxu0 0.0
        %450 = vmatpush1.msra.mxu0 0.0
        %451 = vmatprep.subr.mxu0 0.0
        %452 = vmatpush1.msra.mxu0 0.0
        %453 = vmatprep.subr.mxu0 0.0
        %454 = vmatpush1.msra.mxu0 0.0
        %455 = vmatprep.subr.mxu0 0.0
        %456 = vmatpush1.msra.mxu0 0.0
        %457 = vmatprep.subr.mxu0 0.0
        %458 = vmatpush1.msra.mxu0 0.0
        %459 = vmatprep.subr.mxu0 0.0
        %460 = vmatpush1.msra.mxu0 0.0
        %461 = vmatprep.mubr.f32.mxu0 0.0
        %462 = vmatmul.mubr.f32.gmra.mrb[0].mxu0 %v374
        %v463 = vpop.f32.mrb[0].mxu0
        %v464 = vadd.f32 %v365, %v463
        %v465 = vpop.f32.mrb[0].mxu0
        %v466 = vadd.f32 %v369, %v465
        %467 = vmatprep.mubr.f32.mxu0 0.0
        %468 = vmatmul.mubr.f32.gmra.mrb[0].mxu0 %v377
        %v469 = vpop.f32.mrb[0].mxu0
        %v470 = vadd.f32 %v365, %v469
        %v471 = vpop.f32.mrb[0].mxu0
        %v472 = vadd.f32 %v369, %v471
        %473 = vmatprep.mubr.f32.mxu0 0.0
        %474 = vmatmul.mubr.f32.gmra.mrb[0].mxu0 %v380
        %v475 = vpop.f32.mrb[0].mxu0
        %v476 = vadd.f32 %v365, %v475
        %v477 = vpop.f32.mrb[0].mxu0
        %v478 = vadd.f32 %v369, %v477
        %479 = vmatprep.mubr.f32.mxu0 0.0
        %480 = vmatmul.mubr.f32.gmra.mrb[0].mxu0 %v383
        %v481 = vpop.f32.mrb[0].mxu0
        %v482 = vadd.f32 %v365, %v481
        %v483 = vpop.f32.mrb[0].mxu0
        %v484 = vadd.f32 %v369, %v483
        %485 = vmatprep.mubr.f32.mxu0 0.0
        %486 = vmatmul.mubr.f32.gmra.mrb[0].mxu0 %v386
        %v487 = vpop.f32.mrb[0].mxu0
        %v488 = vadd.f32 %v365, %v487
        %v489 = vpop.f32.mrb[0].mxu0
        %v490 = vadd.f32 %v369, %v489
        %491 = vmatprep.mubr.f32.mxu0 0.0
        %492 = vmatmul.mubr.f32.gmra.mrb[0].mxu0 %v389
        %v493 = vpop.f32.mrb[0].mxu0
        %v494 = vadd.f32 %v365, %v493
        %v495 = vpop.f32.mrb[0].mxu0
        %v496 = vadd.f32 %v369, %v495
        %497 = vmatprep.mubr.f32.mxu0 0.0
        %498 = vmatmul.mubr.f32.gmra.mrb[0].mxu0 %v392
        %v499 = vpop.f32.mrb[0].mxu0
        %v500 = vadd.f32 %v365, %v499
        %v501 = vpop.f32.mrb[0].mxu0
        %v502 = vadd.f32 %v369, %v501
        %503 = vmatprep.mubr.f32.mxu0 0.0
        %504 = vmatmul.mubr.f32.gmra.mrb[0].mxu0 %v395
        %v505 = vpop.f32.mrb[0].mxu0
        %v506 = vadd.f32 %v365, %v505
        %v507 = vpop.f32.mrb[0].mxu0
        %v508 = vadd.f32 %v369, %v507
        %509 = vdwg.mxu0
        %510 = vst [vmem:[%s297] sm:$0xff] %v464
        %511 = vst.msk [vmem:[%s297 + $0x8] sm:$0xff] %vm372, %v466
        %512 = vst [vmem:[%s297 + $0x10] sm:$0xff] %v470
        %513 = vst.msk [vmem:[%s297 + $0x18] sm:$0xff] %vm372, %v472
        %514 = vst [vmem:[%s297 + $0x20] sm:$0xff] %v476
        %515 = vst.msk [vmem:[%s297 + $0x28] sm:$0xff] %vm372, %v478
        %516 = vst [vmem:[%s297 + $0x30] sm:$0xff] %v482
        %517 = vst.msk [vmem:[%s297 + $0x38] sm:$0xff] %vm372, %v484
        %518 = vst [vmem:[%s297 + $0x40] sm:$0xff] %v488
        %519 = vst.msk [vmem:[%s297 + $0x48] sm:$0xff] %vm372, %v490
        %520 = vst [vmem:[%s297 + $0x50] sm:$0xff] %v494
        %521 = vst.msk [vmem:[%s297 + $0x58] sm:$0xff] %vm372, %v496
        %522 = vst [vmem:[%s297 + $0x60] sm:$0xff] %v500
        %523 = vst.msk [vmem:[%s297 + $0x68] sm:$0xff] %vm372, %v502
        %524 = vst [vmem:[%s297 + $0x70] sm:$0xff] %v506
        %525 = vst.msk [vmem:[%s297 + $0x78] sm:$0xff] %vm372, %v508
        %s526 = sand.u32 %s167, 1
        %s527 = scalar_lea.sflag [#allocation4], %s526
        %s528 = sand.u32 %s167, 1
        %s529 = smul.addr %s528, 128
        %s530 = scalar_lea.vmem [#allocation7], %s529
        // Predicated region
        $region49: #{tpu_custom_call.1} parent=39 // pred_check
          %p531 = pneg %p177
        $region50: #{tpu_custom_call.1} parent=39 // pred_check_branch
          %533 = sbr.rel (%p531) target = $region52
        $region51: #{tpu_custom_call.1} parent=39 // pred_region
          %s534 = smul.u32 8, %s28
          %s536 = ssub.s32 2048, 2048
          %537 = vsyncadd %s527, %s536
          %s538 = smul.addr %s534, 2
          %s539 = smul.addr %s27, 16
          %s540 = sadd.s32 %s538, %s539
          %s541 = smul.addr %s540, 128
          %s542 = scalar_lea.hbm %s5, %s541
          %s543 = sshll.u32 %s530, 4
          %s544 = int_to_ptr.vmem [resolvable:$true] %s543
          %549 = dma.vmem_to_hbm [thread:$0]  %s544, 2048, %s542, %s527, 256, 256, 16
        $region52: #{tpu_custom_call.1} parent=39 // pred_fallthru
          _
      $region40: #{tpu_custom_call.1} parent=5 // pred_fallthru
        _
      %p550 = scmp.le.s32.totalorder 2, %s18
      // Predicated region
      $region53: #{tpu_custom_call.1} parent=5 // pred_check
        %p551 = pneg %p550
      $region54: #{tpu_custom_call.1} parent=5 // pred_check_branch
        %553 = sbr.rel (%p551) target = $region56
      $region55: #{tpu_custom_call.1} parent=5 // pred_region
        %s554 = ssub.s32 %s18, 2
        // Predicated region
        $region57: #{tpu_custom_call.1} parent=55 // pred_check
          %p555 = pneg %p183
        $region58: #{tpu_custom_call.1} parent=55 // pred_check_branch
          %557 = sbr.rel (%p555) target = $region60
        $region59: #{tpu_custom_call.1} parent=55 // pred_region
          %s558 = sand.u32 %s168, 1
          %s559 = scalar_lea.sflag [#allocation4], %s558
          %s560 = sand.u32 %s168, 1
          %s561 = smul.addr %s560, 128
          %s562 = scalar_lea.vmem [#allocation7], %s561
          %563 = dma.done %s559, 2048
        $region60: #{tpu_custom_call.1} parent=55 // pred_fallthru
          _
      $region56: #{tpu_custom_call.1} parent=5 // pred_fallthru
        _
    $region6: #{tpu_custom_call.1} parent=1 // loop_footer
      %s22 = sadd.s32 1, %s18
    $region7: #{tpu_custom_call.1} parent=1 // loop_footer_branch
      %17 = sbr.rel target = $region3
    $region8: #{tpu_custom_call.1} parent=1 // loop_exit
      _
    %564 = vsyncpa [#allocation3], 1
    %s565 = scalar_lea.sflag [#allocation3], 1
    %566 = vsyncpa %s565, 1
    %567 = vsyncpa [#allocation6], 1
    %568 = vsyncpa [#allocation4], 1
    %s569 = scalar_lea.sflag [#allocation4], 1
    %570 = vsyncpa %s569, 1

</llo_original>
